<compile_context>
chip_gen: v5e
topology: v5e:2x2
jax: 0.10.0
libtpu: 0.0.40
codegen_flags: <defaults>
</compile_context>

<pallas_src>
import jax
import jax.numpy as jnp
from jax.experimental import pallas as pl
from jax.experimental.pallas import tpu as pltpu


def _round_up(x, m):
    return (x + m - 1) // m * m


def _mlp_kernel(x_ref, w1_ref, sh1_ref, w2_ref, sh2_ref, w3_ref, b3_ref, o_ref):
    # Layer 1: Linear(no bias) with BN scale pre-folded into w1 -> +shift -> ReLU
    h1 = jnp.dot(x_ref[...], w1_ref[...], preferred_element_type=jnp.float32)
    h1 = jnp.maximum(h1 + sh1_ref[...], 0.0).astype(jnp.bfloat16)
    # Dropout (p=0.3) is identity in eval mode.
    # Layer 2: Linear(no bias) with BN scale pre-folded into w2 -> +shift -> ReLU
    h2 = jnp.dot(h1, w2_ref[...], preferred_element_type=jnp.float32)
    h2 = jnp.maximum(h2 + sh2_ref[...], 0.0).astype(jnp.bfloat16)
    # Layer 3: Linear with bias (logits, output N padded to 128 lanes)
    o_ref[...] = (jnp.dot(h2, w3_ref[...], preferred_element_type=jnp.float32)
                  + b3_ref[...])


def nonlinear_classifier(x, params):
    """x: (B, input_dim) float32 -> logits (B, num_classes) float32 (eval)."""
    w1, g1, be1, m1, v1, w2, g2, be2, m2, v2, w3, b3 = params
    eps = 1e-5
    B, input_dim = x.shape
    h1_dim, h2_dim = w1.shape[1], w2.shape[1]
    num_classes = w3.shape[1]

    # Fold BatchNorm (running stats) into the weights (scale) and a shift.
    s1 = g1 / jnp.sqrt(v1 + eps)
    sh1 = (be1 - m1 * s1).reshape(1, -1)                      # f32 (1, 512)
    s2 = g2 / jnp.sqrt(v2 + eps)
    sh2 = (be2 - m2 * s2).reshape(1, -1)                      # f32 (1, 256)
    w1f = w1 * s1[None, :]
    w2f = w2 * s2[None, :]

    # Lane-dense padding of K (input_dim) and N_out (num_classes) to 128.
    K_pad = _round_up(input_dim, 128)
    N_pad = _round_up(num_classes, 128)
    # Batch tile: multiple of 16 (bf16 sublane packing), capped for VMEM
    # (TILE_B=512 live set comfortably fits v7x's 64 MiB / 32 MiB scoped).
    TILE_B = min(512, _round_up(B, 16))
    B_pad = _round_up(B, TILE_B)

    xp = (jnp.zeros((B_pad, K_pad), jnp.float32)
          .at[:B, :input_dim].set(x).astype(jnp.bfloat16))
    w1p = (jnp.zeros((K_pad, h1_dim), jnp.float32)
           .at[:input_dim, :].set(w1f).astype(jnp.bfloat16))
    w2p = w2f.astype(jnp.bfloat16)
    w3p = (jnp.zeros((h2_dim, N_pad), jnp.float32)
           .at[:, :num_classes].set(w3).astype(jnp.bfloat16))
    b3p = jnp.zeros((1, N_pad), jnp.float32).at[0, :num_classes].set(b3)

    const = lambda i: (0, 0)
    out = pl.pallas_call(
        _mlp_kernel,
        out_shape=jax.ShapeDtypeStruct((B_pad, N_pad), jnp.float32),
        grid=(B_pad // TILE_B,),
        in_specs=[
            pl.BlockSpec((TILE_B, K_pad), lambda i: (i, 0)),   # x tile
            pl.BlockSpec((K_pad, h1_dim), const),              # w1 (resident)
            pl.BlockSpec((1, h1_dim), const),                  # shift1
            pl.BlockSpec((h1_dim, h2_dim), const),             # w2 (resident)
            pl.BlockSpec((1, h2_dim), const),                  # shift2
            pl.BlockSpec((h2_dim, N_pad), const),              # w3 (resident)
            pl.BlockSpec((1, N_pad), const),                   # bias3
        ],
        out_specs=pl.BlockSpec((TILE_B, N_pad), lambda i: (i, 0)),
        compiler_params=pltpu.CompilerParams(
            dimension_semantics=("parallel",)),
    )(xp, w1p, sh1, w2p, sh2, w3p, b3p)
    return out[:B, :num_classes]


def _reference(x, params):
    """Pure-JAX f32 eval-mode reference."""
    w1, g1, be1, m1, v1, w2, g2, be2, m2, v2, w3, b3 = params
    eps = 1e-5
    h = x @ w1
    h = jax.nn.relu((h - m1) / jnp.sqrt(v1 + eps) * g1 + be1)
    h = h @ w2
    h = jax.nn.relu((h - m2) / jnp.sqrt(v2 + eps) * g2 + be2)
    return h @ w3 + b3


def _kaiming_uniform(key, fan_in, fan_out):
    # torch kaiming_uniform_ default: a=0, fan_in mode, gain=sqrt(2)
    bound = jnp.sqrt(6.0 / fan_in)
    # stored as (in, out) = PyTorch weight.T
    return jax.random.uniform(key, (fan_in, fan_out), jnp.float32, -bound, bound)


def init_params(key, input_dim, num_classes):
    k1, k2, k3 = jax.random.split(key, 3)
    w1 = _kaiming_uniform(k1, input_dim, 512)
    w2 = _kaiming_uniform(k2, 512, 256)
    w3 = _kaiming_uniform(k3, 256, num_classes)
    b3 = jnp.zeros((num_classes,), jnp.float32)
    # Fresh BatchNorm1d parameters / running stats.
    g1, be1 = jnp.ones((512,), jnp.float32), jnp.zeros((512,), jnp.float32)
    m1, v1 = jnp.zeros((512,), jnp.float32), jnp.ones((512,), jnp.float32)
    g2, be2 = jnp.ones((256,), jnp.float32), jnp.zeros((256,), jnp.float32)
    m2, v2 = jnp.zeros((256,), jnp.float32), jnp.ones((256,), jnp.float32)
    return (w1, g1, be1, m1, v1, w2, g2, be2, m2, v2, w3, b3)


if __name__ == "__main__":
    key = jax.random.PRNGKey(0)
    kx, kp = jax.random.split(key)

    batch, input_dim, num_classes = 8, 64, 10
    x = jax.random.normal(kx, (batch, input_dim), jnp.float32)
    params = init_params(kp, input_dim, num_classes)

    out = jax.jit(nonlinear_classifier)(x, params)
    out = jax.block_until_ready(out)

    ref = _reference(x, params)
    assert out.shape == (batch, num_classes)
    # bf16 matmul inputs (f32 accumulation) -> relaxed tolerance vs f32 ref.
    assert jnp.allclose(out, ref, atol=1e-1, rtol=1e-2), (
        float(jnp.max(jnp.abs(out - ref))))

    print("KERNEL_OK")
</pallas_src>

<mosaic_0001>
module attributes {stable_mosaic.version = 11 : i64} {
  func.func @_mlp_kernel(%arg0: i32, %arg1: memref<16x128xbf16, #tpu.memory_space<vmem>>, %arg2: memref<128x512xbf16, #tpu.memory_space<vmem>>, %arg3: memref<1x512xf32, #tpu.memory_space<vmem>>, %arg4: memref<512x256xbf16, #tpu.memory_space<vmem>>, %arg5: memref<1x256xf32, #tpu.memory_space<vmem>>, %arg6: memref<256x128xbf16, #tpu.memory_space<vmem>>, %arg7: memref<1x128xf32, #tpu.memory_space<vmem>>, %arg8: memref<16x128xf32, #tpu.memory_space<vmem>>) attributes {dimension_semantics = [#tpu.dimension_semantics<parallel>], iteration_bounds = array<i64: 1>, scalar_prefetch = 0 : i64, scratch_operands = 0 : i64, tpu.core_type = #tpu.core_type<tc>, window_params = [{transform_indices = @transform_0, window_bounds = array<i64: 16, 128>}, {pipeline_mode = #tpu.pipeline_mode<synchronous>, transform_indices = @transform_1, window_bounds = array<i64: 128, 512>}, {pipeline_mode = #tpu.pipeline_mode<synchronous>, transform_indices = @transform_2, window_bounds = array<i64: 1, 512>}, {pipeline_mode = #tpu.pipeline_mode<synchronous>, transform_indices = @transform_3, window_bounds = array<i64: 512, 256>}, {pipeline_mode = #tpu.pipeline_mode<synchronous>, transform_indices = @transform_4, window_bounds = array<i64: 1, 256>}, {pipeline_mode = #tpu.pipeline_mode<synchronous>, transform_indices = @transform_5, window_bounds = array<i64: 256, 128>}, {pipeline_mode = #tpu.pipeline_mode<synchronous>, transform_indices = @transform_6, window_bounds = array<i64: 1, 128>}, {transform_indices = @transform_7, window_bounds = array<i64: 16, 128>}]} {
    %c0 = arith.constant 0 : index
    %c0_0 = arith.constant 0 : index
    %0 = vector.load %arg1[%c0, %c0_0] : memref<16x128xbf16, #tpu.memory_space<vmem>>, vector<16x128xbf16>
    %c0_1 = arith.constant 0 : index
    %c0_2 = arith.constant 0 : index
    %1 = vector.load %arg2[%c0_1, %c0_2] : memref<128x512xbf16, #tpu.memory_space<vmem>>, vector<128x512xbf16>
    %cst = arith.constant dense<0.000000e+00> : vector<16x512xf32>
    %2 = tpu.matmul %0, %1, %cst {dimension_numbers = #tpu.dot_dimension_numbers<[1], [0], [0], [1], [0, 0, 1, 1], [], []>} : vector<16x128xbf16>, vector<128x512xbf16>, vector<16x512xf32> -> vector<16x512xf32>
    %c0_3 = arith.constant 0 : index
    %c0_4 = arith.constant 0 : index
    %3 = vector.load %arg3[%c0_3, %c0_4] : memref<1x512xf32, #tpu.memory_space<vmem>>, vector<1x512xf32>
    %4 = vector.broadcast %3 : vector<1x512xf32> to vector<16x512xf32>
    %5 = arith.addf %2, %4 : vector<16x512xf32>
    %cst_5 = arith.constant 0.000000e+00 : f32
    %6 = vector.broadcast %cst_5 : f32 to vector<16x512xf32>
    %7 = arith.maximumf %5, %6 : vector<16x512xf32>
    %8 = arith.truncf %7 : vector<16x512xf32> to vector<16x512xbf16>
    %c0_6 = arith.constant 0 : index
    %c0_7 = arith.constant 0 : index
    %9 = vector.load %arg4[%c0_6, %c0_7] : memref<512x256xbf16, #tpu.memory_space<vmem>>, vector<512x256xbf16>
    %cst_8 = arith.constant dense<0.000000e+00> : vector<16x256xf32>
    %10 = tpu.matmul %8, %9, %cst_8 {dimension_numbers = #tpu.dot_dimension_numbers<[1], [0], [0], [1], [0, 0, 1, 1], [], []>} : vector<16x512xbf16>, vector<512x256xbf16>, vector<16x256xf32> -> vector<16x256xf32>
    %c0_9 = arith.constant 0 : index
    %c0_10 = arith.constant 0 : index
    %11 = vector.load %arg5[%c0_9, %c0_10] : memref<1x256xf32, #tpu.memory_space<vmem>>, vector<1x256xf32>
    %12 = vector.broadcast %11 : vector<1x256xf32> to vector<16x256xf32>
    %13 = arith.addf %10, %12 : vector<16x256xf32>
    %cst_11 = arith.constant 0.000000e+00 : f32
    %14 = vector.broadcast %cst_11 : f32 to vector<16x256xf32>
    %15 = arith.maximumf %13, %14 : vector<16x256xf32>
    %16 = arith.truncf %15 : vector<16x256xf32> to vector<16x256xbf16>
    %c0_12 = arith.constant 0 : index
    %c0_13 = arith.constant 0 : index
    %17 = vector.load %arg6[%c0_12, %c0_13] : memref<256x128xbf16, #tpu.memory_space<vmem>>, vector<256x128xbf16>
    %cst_14 = arith.constant dense<0.000000e+00> : vector<16x128xf32>
    %18 = tpu.matmul %16, %17, %cst_14 {dimension_numbers = #tpu.dot_dimension_numbers<[1], [0], [0], [1], [0, 0, 1, 1], [], []>} : vector<16x256xbf16>, vector<256x128xbf16>, vector<16x128xf32> -> vector<16x128xf32>
    %c0_15 = arith.constant 0 : index
    %c0_16 = arith.constant 0 : index
    %19 = vector.load %arg7[%c0_15, %c0_16] : memref<1x128xf32, #tpu.memory_space<vmem>>, vector<1x128xf32>
    %20 = vector.broadcast %19 : vector<1x128xf32> to vector<16x128xf32>
    %21 = arith.addf %18, %20 : vector<16x128xf32>
    %c0_17 = arith.constant 0 : index
    %c0_18 = arith.constant 0 : index
    %22 = vector.load %arg8[%c0_17, %c0_18] : memref<16x128xf32, #tpu.memory_space<vmem>>, vector<16x128xf32>
    tpu.vector_store %arg8[%c0_17, %c0_18], %21 {strides = array<i32>} : memref<16x128xf32, #tpu.memory_space<vmem>>, vector<16x128xf32>,
    return
  }
  func.func @transform_0(%arg0: i32) -> (i32, i32) {
    %c0_i32 = arith.constant 0 : i32
    %c0_i32_0 = arith.constant 0 : i32
    return %arg0, %c0_i32 : i32, i32
  }
  func.func @transform_1(%arg0: i32) -> (i32, i32) {
    %c0_i32 = arith.constant 0 : i32
    %c0_i32_0 = arith.constant 0 : i32
    %c0_i32_1 = arith.constant 0 : i32
    return %c0_i32, %c0_i32_0 : i32, i32
  }
  func.func @transform_2(%arg0: i32) -> (i32, i32) {
    %c0_i32 = arith.constant 0 : i32
    %c0_i32_0 = arith.constant 0 : i32
    %c0_i32_1 = arith.constant 0 : i32
    return %c0_i32, %c0_i32_0 : i32, i32
  }
  func.func @transform_3(%arg0: i32) -> (i32, i32) {
    %c0_i32 = arith.constant 0 : i32
    %c0_i32_0 = arith.constant 0 : i32
    %c0_i32_1 = arith.constant 0 : i32
    return %c0_i32, %c0_i32_0 : i32, i32
  }
  func.func @transform_4(%arg0: i32) -> (i32, i32) {
    %c0_i32 = arith.constant 0 : i32
    %c0_i32_0 = arith.constant 0 : i32
    %c0_i32_1 = arith.constant 0 : i32
    return %c0_i32, %c0_i32_0 : i32, i32
  }
  func.func @transform_5(%arg0: i32) -> (i32, i32) {
    %c0_i32 = arith.constant 0 : i32
    %c0_i32_0 = arith.constant 0 : i32
    %c0_i32_1 = arith.constant 0 : i32
    return %c0_i32, %c0_i32_0 : i32, i32
  }
  func.func @transform_6(%arg0: i32) -> (i32, i32) {
    %c0_i32 = arith.constant 0 : i32
    %c0_i32_0 = arith.constant 0 : i32
    %c0_i32_1 = arith.constant 0 : i32
    return %c0_i32, %c0_i32_0 : i32, i32
  }
  func.func @transform_7(%arg0: i32) -> (i32, i32) {
    %c0_i32 = arith.constant 0 : i32
    %c0_i32_0 = arith.constant 0 : i32
    return %arg0, %c0_i32 : i32, i32
  }
}

</mosaic_0001>

<llo_original>
// kernel: nonlinear_classifier.1
$region0: #{nonlinear_classifier.1}
  #allocation0 [shape = 'u32[]', space=smem, size = 0x4, offset = 0x4, fixed_abs, tag = 'smem constant byte address 0x4 - core index']
  #allocation1 [shape = 'u32[72,128]{1,0:T(1,128)}', space=vmem, size = 0x9000, scoped, tag = 'internal scratch']
  %s0 = inlined_call_operand.vmem [shape: bf16[16,128], index: 0, kind: input, shape index: {}]
  %s1 = inlined_call_operand.vmem [shape: bf16[128,512], index: 1, kind: input, shape index: {}]
  %s2 = inlined_call_operand.vmem [shape: f32[1,512], index: 2, kind: input, shape index: {}]
  %s3 = inlined_call_operand.vmem [shape: bf16[512,256], index: 3, kind: input, shape index: {}]
  %s4 = inlined_call_operand.vmem [shape: f32[1,256], index: 4, kind: input, shape index: {}]
  %s5 = inlined_call_operand.vmem [shape: bf16[256,128], index: 5, kind: input, shape index: {}]
  %s6 = inlined_call_operand.vmem [shape: f32[1,128], index: 6, kind: input, shape index: {}]
  %s7 = inlined_call_operand.vmem [shape: f32[16,128], index: 7, kind: output, shape index: {}]
  %s8 = sld [smem:[#allocation0]]
  $region38: #{nonlinear_classifier.1} parent=0
    _
  %s10 = ssub.s32 1, %s8
  %s11 = scalar_select 0, %s10, %s8
  // Predicated region
  $region2: #{nonlinear_classifier.1} parent=0 // pred_check
    _
  $region3: #{nonlinear_classifier.1} parent=0 // pred_check_branch
    %13 = sbr.rel (0) target = $region5
  $region4: #{nonlinear_classifier.1} parent=0 // pred_region
    _
  $region5: #{nonlinear_classifier.1} parent=0 // pred_fallthru
    _
  // Predicated region
  $region6: #{nonlinear_classifier.1} parent=0 // pred_check
    _
  $region7: #{nonlinear_classifier.1} parent=0 // pred_check_branch
    %15 = sbr.rel (0) target = $region9
  $region8: #{nonlinear_classifier.1} parent=0 // pred_region
    _
  $region9: #{nonlinear_classifier.1} parent=0 // pred_fallthru
    _
  // Predicated region
  $region10: #{nonlinear_classifier.1} parent=0 // pred_check
    _
  $region11: #{nonlinear_classifier.1} parent=0 // pred_check_branch
    %17 = sbr.rel (0) target = $region13
  $region12: #{nonlinear_classifier.1} parent=0 // pred_region
    _
  $region13: #{nonlinear_classifier.1} parent=0 // pred_fallthru
    _
  // Predicated region
  $region14: #{nonlinear_classifier.1} parent=0 // pred_check
    _
  $region15: #{nonlinear_classifier.1} parent=0 // pred_check_branch
    %19 = sbr.rel (0) target = $region17
  $region16: #{nonlinear_classifier.1} parent=0 // pred_region
    _
  $region17: #{nonlinear_classifier.1} parent=0 // pred_fallthru
    _
  // Predicated region
  $region18: #{nonlinear_classifier.1} parent=0 // pred_check
    _
  $region19: #{nonlinear_classifier.1} parent=0 // pred_check_branch
    %21 = sbr.rel (0) target = $region21
  $region20: #{nonlinear_classifier.1} parent=0 // pred_region
    _
  $region21: #{nonlinear_classifier.1} parent=0 // pred_fallthru
    _
  // Predicated region
  $region22: #{nonlinear_classifier.1} parent=0 // pred_check
    _
  $region23: #{nonlinear_classifier.1} parent=0 // pred_check_branch
    %23 = sbr.rel (0) target = $region25
  $region24: #{nonlinear_classifier.1} parent=0 // pred_region
    _
  $region25: #{nonlinear_classifier.1} parent=0 // pred_fallthru
    _
  // Predicated region
  $region26: #{nonlinear_classifier.1} parent=0 // pred_check
    _
  $region27: #{nonlinear_classifier.1} parent=0 // pred_check_branch
    %25 = sbr.rel (0) target = $region29
  $region28: #{nonlinear_classifier.1} parent=0 // pred_region
    _
  $region29: #{nonlinear_classifier.1} parent=0 // pred_fallthru
    _
  %v26 = vld [vmem:[%s0] sm:$0xf]
  %v27 = vld [vmem:[%s0 + $0x4] sm:$0xf]
  %v28 = vld [vmem:[%s1] sm:$0xff]
  %v29 = vld [vmem:[%s1 + $0x8] sm:$0xff]
  %v30 = vld [vmem:[%s1 + $0x10] sm:$0xff]
  %v31 = vld [vmem:[%s1 + $0x18] sm:$0xff]
  %v32 = vld [vmem:[%s1 + $0x20] sm:$0xff]
  %v33 = vld [vmem:[%s1 + $0x28] sm:$0xff]
  %v34 = vld [vmem:[%s1 + $0x30] sm:$0xff]
  %v35 = vld [vmem:[%s1 + $0x38] sm:$0xff]
  %v36 = vld [vmem:[%s1 + $0x40] sm:$0xff]
  %v37 = vld [vmem:[%s1 + $0x48] sm:$0xff]
  %v38 = vld [vmem:[%s1 + $0x50] sm:$0xff]
  %v39 = vld [vmem:[%s1 + $0x58] sm:$0xff]
  %v40 = vld [vmem:[%s1 + $0x60] sm:$0xff]
  %v41 = vld [vmem:[%s1 + $0x68] sm:$0xff]
  %v42 = vld [vmem:[%s1 + $0x70] sm:$0xff]
  %v43 = vld [vmem:[%s1 + $0x78] sm:$0xff]
  %v44 = vld [vmem:[%s1 + $0x80] sm:$0xff]
  %v45 = vld [vmem:[%s1 + $0x88] sm:$0xff]
  %v46 = vld [vmem:[%s1 + $0x90] sm:$0xff]
  %v47 = vld [vmem:[%s1 + $0x98] sm:$0xff]
  %v48 = vld [vmem:[%s1 + $0xa0] sm:$0xff]
  %v49 = vld [vmem:[%s1 + $0xa8] sm:$0xff]
  %v50 = vld [vmem:[%s1 + $0xb0] sm:$0xff]
  %v51 = vld [vmem:[%s1 + $0xb8] sm:$0xff]
  %v52 = vld [vmem:[%s1 + $0xc0] sm:$0xff]
  %v53 = vld [vmem:[%s1 + $0xc8] sm:$0xff]
  %v54 = vld [vmem:[%s1 + $0xd0] sm:$0xff]
  %v55 = vld [vmem:[%s1 + $0xd8] sm:$0xff]
  %v56 = vld [vmem:[%s1 + $0xe0] sm:$0xff]
  %v57 = vld [vmem:[%s1 + $0xe8] sm:$0xff]
  %v58 = vld [vmem:[%s1 + $0xf0] sm:$0xff]
  %v59 = vld [vmem:[%s1 + $0xf8] sm:$0xff]
  %v60 = vld [vmem:[%s2] sm:$0xf]
  %v62 = vperm.slane %v60, 0
  %v63 = vperm.slane %v60, 1
  %v64 = vperm.slane %v60, 2
  %v65 = vperm.slane %v60, 3
  %v72 = vunpack.c.l.b16 %v26
  %v73 = vunpack.c.l.b16 %v27
  %v74 = vpack.c.b16 %v73, %v72
  %v108 = vunpack.c.l.b16 %v28
  %v109 = vunpack.c.h.b16 %v28
  %v110 = vunpack.c.l.b16 %v29
  %v111 = vunpack.c.h.b16 %v29
  %v112 = vunpack.c.l.b16 %v30
  %v113 = vunpack.c.h.b16 %v30
  %v114 = vunpack.c.l.b16 %v31
  %v115 = vunpack.c.h.b16 %v31
  %v116 = vunpack.c.l.b16 %v32
  %v117 = vunpack.c.h.b16 %v32
  %v118 = vunpack.c.l.b16 %v33
  %v119 = vunpack.c.h.b16 %v33
  %v120 = vunpack.c.l.b16 %v34
  %v121 = vunpack.c.h.b16 %v34
  %v122 = vunpack.c.l.b16 %v35
  %v123 = vunpack.c.h.b16 %v35
  %v124 = vunpack.c.l.b16 %v36
  %v125 = vunpack.c.h.b16 %v36
  %v126 = vunpack.c.l.b16 %v37
  %v127 = vunpack.c.h.b16 %v37
  %v128 = vunpack.c.l.b16 %v38
  %v129 = vunpack.c.h.b16 %v38
  %v130 = vunpack.c.l.b16 %v39
  %v131 = vunpack.c.h.b16 %v39
  %v132 = vunpack.c.l.b16 %v40
  %v133 = vunpack.c.h.b16 %v40
  %v134 = vunpack.c.l.b16 %v41
  %v135 = vunpack.c.h.b16 %v41
  %v136 = vunpack.c.l.b16 %v42
  %v137 = vunpack.c.h.b16 %v42
  %v138 = vunpack.c.l.b16 %v43
  %v139 = vunpack.c.h.b16 %v43
  %v140 = vunpack.c.l.b16 %v44
  %v141 = vunpack.c.h.b16 %v44
  %v142 = vunpack.c.l.b16 %v45
  %v143 = vunpack.c.h.b16 %v45
  %v144 = vunpack.c.l.b16 %v46
  %v145 = vunpack.c.h.b16 %v46
  %v146 = vunpack.c.l.b16 %v47
  %v147 = vunpack.c.h.b16 %v47
  %v148 = vunpack.c.l.b16 %v48
  %v149 = vunpack.c.h.b16 %v48
  %v150 = vunpack.c.l.b16 %v49
  %v151 = vunpack.c.h.b16 %v49
  %v152 = vunpack.c.l.b16 %v50
  %v153 = vunpack.c.h.b16 %v50
  %v154 = vunpack.c.l.b16 %v51
  %v155 = vunpack.c.h.b16 %v51
  %v156 = vunpack.c.l.b16 %v52
  %v157 = vunpack.c.h.b16 %v52
  %v158 = vunpack.c.l.b16 %v53
  %v159 = vunpack.c.h.b16 %v53
  %v160 = vunpack.c.l.b16 %v54
  %v161 = vunpack.c.h.b16 %v54
  %v162 = vunpack.c.l.b16 %v55
  %v163 = vunpack.c.h.b16 %v55
  %v164 = vunpack.c.l.b16 %v56
  %v165 = vunpack.c.h.b16 %v56
  %v166 = vunpack.c.l.b16 %v57
  %v167 = vunpack.c.h.b16 %v57
  %v168 = vunpack.c.l.b16 %v58
  %v169 = vunpack.c.h.b16 %v58
  %v170 = vunpack.c.l.b16 %v59
  %v171 = vunpack.c.h.b16 %v59
  %v172 = vpack.c.b16 %v112, %v108
  %v173 = vpack.c.b16 %v113, %v109
  %v174 = vpack.c.b16 %v114, %v110
  %v175 = vpack.c.b16 %v115, %v111
  %v176 = vpack.c.b16 %v120, %v116
  %v177 = vpack.c.b16 %v121, %v117
  %v178 = vpack.c.b16 %v122, %v118
  %v179 = vpack.c.b16 %v123, %v119
  %v180 = vpack.c.b16 %v128, %v124
  %v181 = vpack.c.b16 %v129, %v125
  %v182 = vpack.c.b16 %v130, %v126
  %v183 = vpack.c.b16 %v131, %v127
  %v184 = vpack.c.b16 %v136, %v132
  %v185 = vpack.c.b16 %v137, %v133
  %v186 = vpack.c.b16 %v138, %v134
  %v187 = vpack.c.b16 %v139, %v135
  %v188 = vpack.c.b16 %v144, %v140
  %v189 = vpack.c.b16 %v145, %v141
  %v190 = vpack.c.b16 %v146, %v142
  %v191 = vpack.c.b16 %v147, %v143
  %v192 = vpack.c.b16 %v152, %v148
  %v193 = vpack.c.b16 %v153, %v149
  %v194 = vpack.c.b16 %v154, %v150
  %v195 = vpack.c.b16 %v155, %v151
  %v196 = vpack.c.b16 %v160, %v156
  %v197 = vpack.c.b16 %v161, %v157
  %v198 = vpack.c.b16 %v162, %v158
  %v199 = vpack.c.b16 %v163, %v159
  %v200 = vpack.c.b16 %v168, %v164
  %v201 = vpack.c.b16 %v169, %v165
  %v202 = vpack.c.b16 %v170, %v166
  %v203 = vpack.c.b16 %v171, %v167
  %236 = vmatpush.bf16.msra.mxu0 %v200
  %237 = vmatpush.bf16.msra.mxu0 %v196
  %238 = vmatpush.bf16.msra.mxu0 %v192
  %239 = vmatpush.bf16.msra.mxu0 %v188
  %240 = vmatpush.bf16.msra.mxu0 %v184
  %241 = vmatpush.bf16.msra.mxu0 %v180
  %242 = vmatpush.bf16.msra.mxu0 %v176
  %243 = vmatpush.bf16.msra.mxu0 %v172
  %244 = vmatmul.bf16.gmra.mxu0 %v74
  %v245 = vpop.f32.mrf.mxu0
  %v246 = vadd.f32 %v62, %v245
  %v247 = vpop.f32.mrf.mxu0
  %v248 = vadd.f32 %v62, %v247
  %249 = vdwg.mxu0
  %250 = vmatpush.bf16.msra.mxu0 %v201
  %251 = vmatpush.bf16.msra.mxu0 %v197
  %252 = vmatpush.bf16.msra.mxu0 %v193
  %253 = vmatpush.bf16.msra.mxu0 %v189
  %254 = vmatpush.bf16.msra.mxu0 %v185
  %255 = vmatpush.bf16.msra.mxu0 %v181
  %256 = vmatpush.bf16.msra.mxu0 %v177
  %257 = vmatpush.bf16.msra.mxu0 %v173
  %258 = vmatmul.bf16.gmra.mxu0 %v74
  %v259 = vpop.f32.mrf.mxu0
  %v260 = vadd.f32 %v63, %v259
  %v261 = vpop.f32.mrf.mxu0
  %v262 = vadd.f32 %v63, %v261
  %263 = vdwg.mxu0
  %264 = vmatpush.bf16.msra.mxu0 %v202
  %265 = vmatpush.bf16.msra.mxu0 %v198
  %266 = vmatpush.bf16.msra.mxu0 %v194
  %267 = vmatpush.bf16.msra.mxu0 %v190
  %268 = vmatpush.bf16.msra.mxu0 %v186
  %269 = vmatpush.bf16.msra.mxu0 %v182
  %270 = vmatpush.bf16.msra.mxu0 %v178
  %271 = vmatpush.bf16.msra.mxu0 %v174
  %272 = vmatmul.bf16.gmra.mxu0 %v74
  %v273 = vpop.f32.mrf.mxu0
  %v274 = vadd.f32 %v64, %v273
  %v275 = vpop.f32.mrf.mxu0
  %v276 = vadd.f32 %v64, %v275
  %277 = vdwg.mxu0
  %278 = vmatpush.bf16.msra.mxu0 %v203
  %279 = vmatpush.bf16.msra.mxu0 %v199
  %280 = vmatpush.bf16.msra.mxu0 %v195
  %281 = vmatpush.bf16.msra.mxu0 %v191
  %282 = vmatpush.bf16.msra.mxu0 %v187
  %283 = vmatpush.bf16.msra.mxu0 %v183
  %284 = vmatpush.bf16.msra.mxu0 %v179
  %285 = vmatpush.bf16.msra.mxu0 %v175
  %286 = vmatmul.bf16.gmra.mxu0 %v74
  %v287 = vpop.f32.mrf.mxu0
  %v288 = vadd.f32 %v65, %v287
  %v289 = vpop.f32.mrf.mxu0
  %v290 = vadd.f32 %v65, %v289
  %291 = vdwg.mxu0
  %v292 = vmax.f32 %v246, 0.0
  %v293 = vmax.f32 %v260, 0.0
  %v294 = vmax.f32 %v274, 0.0
  %v295 = vmax.f32 %v288, 0.0
  %v296 = vmax.f32 %v248, 0.0
  %v297 = vmax.f32 %v262, 0.0
  %v298 = vmax.f32 %v276, 0.0
  %v299 = vmax.f32 %v290, 0.0
  %v300 = vpack.c.bf16 %v296, %v292
  %v301 = vpack.c.bf16 %v297, %v293
  %v302 = vpack.c.bf16 %v298, %v294
  %v303 = vpack.c.bf16 %v299, %v295
  %v304 = vld [vmem:[%s3] sm:$0xff]
  %v305 = vld [vmem:[%s3 + $0x8] sm:$0xff]
  %v306 = vld [vmem:[%s3 + $0x10] sm:$0xff]
  %v307 = vld [vmem:[%s3 + $0x18] sm:$0xff]
  %v308 = vld [vmem:[%s3 + $0x20] sm:$0xff]
  %v309 = vld [vmem:[%s3 + $0x28] sm:$0xff]
  %v310 = vld [vmem:[%s3 + $0x30] sm:$0xff]
  %v311 = vld [vmem:[%s3 + $0x38] sm:$0xff]
  %v312 = vld [vmem:[%s3 + $0x40] sm:$0xff]
  %v313 = vld [vmem:[%s3 + $0x48] sm:$0xff]
  %v314 = vld [vmem:[%s3 + $0x50] sm:$0xff]
  %v315 = vld [vmem:[%s3 + $0x58] sm:$0xff]
  %v316 = vld [vmem:[%s3 + $0x60] sm:$0xff]
  %v317 = vld [vmem:[%s3 + $0x68] sm:$0xff]
  %v318 = vld [vmem:[%s3 + $0x70] sm:$0xff]
  %v319 = vld [vmem:[%s3 + $0x78] sm:$0xff]
  %v320 = vld [vmem:[%s3 + $0x80] sm:$0xff]
  %v321 = vld [vmem:[%s3 + $0x88] sm:$0xff]
  %v322 = vld [vmem:[%s3 + $0x90] sm:$0xff]
  %v323 = vld [vmem:[%s3 + $0x98] sm:$0xff]
  %v324 = vld [vmem:[%s3 + $0xa0] sm:$0xff]
  %v325 = vld [vmem:[%s3 + $0xa8] sm:$0xff]
  %v326 = vld [vmem:[%s3 + $0xb0] sm:$0xff]
  %v327 = vld [vmem:[%s3 + $0xb8] sm:$0xff]
  %v328 = vld [vmem:[%s3 + $0xc0] sm:$0xff]
  %v329 = vld [vmem:[%s3 + $0xc8] sm:$0xff]
  %v330 = vld [vmem:[%s3 + $0xd0] sm:$0xff]
  %v331 = vld [vmem:[%s3 + $0xd8] sm:$0xff]
  %v332 = vld [vmem:[%s3 + $0xe0] sm:$0xff]
  %v333 = vld [vmem:[%s3 + $0xe8] sm:$0xff]
  %v334 = vld [vmem:[%s3 + $0xf0] sm:$0xff]
  %v335 = vld [vmem:[%s3 + $0xf8] sm:$0xff]
  %v336 = vld [vmem:[%s3 + $0x100] sm:$0xff]
  %v337 = vld [vmem:[%s3 + $0x108] sm:$0xff]
  %v338 = vld [vmem:[%s3 + $0x110] sm:$0xff]
  %v339 = vld [vmem:[%s3 + $0x118] sm:$0xff]
  %v340 = vld [vmem:[%s3 + $0x120] sm:$0xff]
  %v341 = vld [vmem:[%s3 + $0x128] sm:$0xff]
  %v342 = vld [vmem:[%s3 + $0x130] sm:$0xff]
  %v343 = vld [vmem:[%s3 + $0x138] sm:$0xff]
  %v344 = vld [vmem:[%s3 + $0x140] sm:$0xff]
  %v345 = vld [vmem:[%s3 + $0x148] sm:$0xff]
  %v346 = vld [vmem:[%s3 + $0x150] sm:$0xff]
  %v347 = vld [vmem:[%s3 + $0x158] sm:$0xff]
  %v348 = vld [vmem:[%s3 + $0x160] sm:$0xff]
  %v349 = vld [vmem:[%s3 + $0x168] sm:$0xff]
  %v350 = vld [vmem:[%s3 + $0x170] sm:$0xff]
  %v351 = vld [vmem:[%s3 + $0x178] sm:$0xff]
  %v352 = vld [vmem:[%s3 + $0x180] sm:$0xff]
  %v353 = vld [vmem:[%s3 + $0x188] sm:$0xff]
  %v354 = vld [vmem:[%s3 + $0x190] sm:$0xff]
  %v355 = vld [vmem:[%s3 + $0x198] sm:$0xff]
  %v356 = vld [vmem:[%s3 + $0x1a0] sm:$0xff]
  %v357 = vld [vmem:[%s3 + $0x1a8] sm:$0xff]
  %v358 = vld [vmem:[%s3 + $0x1b0] sm:$0xff]
  %v359 = vld [vmem:[%s3 + $0x1b8] sm:$0xff]
  %v360 = vld [vmem:[%s3 + $0x1c0] sm:$0xff]
  %v361 = vld [vmem:[%s3 + $0x1c8] sm:$0xff]
  %v362 = vld [vmem:[%s3 + $0x1d0] sm:$0xff]
  %v363 = vld [vmem:[%s3 + $0x1d8] sm:$0xff]
  %v364 = vld [vmem:[%s3 + $0x1e0] sm:$0xff]
  %v365 = vld [vmem:[%s3 + $0x1e8] sm:$0xff]
  %v366 = vld [vmem:[%s3 + $0x1f0] sm:$0xff]
  %v367 = vld [vmem:[%s3 + $0x1f8] sm:$0xff]
  %v368 = vld [vmem:[%s4] sm:$0x3]
  %v370 = vperm.slane %v368, 0
  %v371 = vperm.slane %v368, 1
  %v438 = vunpack.c.l.b16 %v304
  %v439 = vunpack.c.h.b16 %v304
  %v440 = vunpack.c.l.b16 %v305
  %v441 = vunpack.c.h.b16 %v305
  %v442 = vunpack.c.l.b16 %v306
  %v443 = vunpack.c.h.b16 %v306
  %v444 = vunpack.c.l.b16 %v307
  %v445 = vunpack.c.h.b16 %v307
  %v446 = vunpack.c.l.b16 %v308
  %v447 = vunpack.c.h.b16 %v308
  %v448 = vunpack.c.l.b16 %v309
  %v449 = vunpack.c.h.b16 %v309
  %v450 = vunpack.c.l.b16 %v310
  %v451 = vunpack.c.h.b16 %v310
  %v452 = vunpack.c.l.b16 %v311
  %v453 = vunpack.c.h.b16 %v311
  %v454 = vunpack.c.l.b16 %v312
  %v455 = vunpack.c.h.b16 %v312
  %v456 = vunpack.c.l.b16 %v313
  %v457 = vunpack.c.h.b16 %v313
  %v458 = vunpack.c.l.b16 %v314
  %v459 = vunpack.c.h.b16 %v314
  %v460 = vunpack.c.l.b16 %v315
  %v461 = vunpack.c.h.b16 %v315
  %v462 = vunpack.c.l.b16 %v316
  %v463 = vunpack.c.h.b16 %v316
  %v464 = vunpack.c.l.b16 %v317
  %v465 = vunpack.c.h.b16 %v317
  %v466 = vunpack.c.l.b16 %v318
  %v467 = vunpack.c.h.b16 %v318
  %v468 = vunpack.c.l.b16 %v319
  %v469 = vunpack.c.h.b16 %v319
  %v470 = vunpack.c.l.b16 %v320
  %v471 = vunpack.c.h.b16 %v320
  %v472 = vunpack.c.l.b16 %v321
  %v473 = vunpack.c.h.b16 %v321
  %v474 = vunpack.c.l.b16 %v322
  %v475 = vunpack.c.h.b16 %v322
  %v476 = vunpack.c.l.b16 %v323
  %v477 = vunpack.c.h.b16 %v323
  %v478 = vunpack.c.l.b16 %v324
  %v479 = vunpack.c.h.b16 %v324
  %v480 = vunpack.c.l.b16 %v325
  %v481 = vunpack.c.h.b16 %v325
  %v482 = vunpack.c.l.b16 %v326
  %v483 = vunpack.c.h.b16 %v326
  %v484 = vunpack.c.l.b16 %v327
  %v485 = vunpack.c.h.b16 %v327
  %v486 = vunpack.c.l.b16 %v328
  %v487 = vunpack.c.h.b16 %v328
  %v488 = vunpack.c.l.b16 %v329
  %v489 = vunpack.c.h.b16 %v329
  %v490 = vunpack.c.l.b16 %v330
  %v491 = vunpack.c.h.b16 %v330
  %v492 = vunpack.c.l.b16 %v331
  %v493 = vunpack.c.h.b16 %v331
  %v494 = vunpack.c.l.b16 %v332
  %v495 = vunpack.c.h.b16 %v332
  %v496 = vunpack.c.l.b16 %v333
  %v497 = vunpack.c.h.b16 %v333
  %v498 = vunpack.c.l.b16 %v334
  %v499 = vunpack.c.h.b16 %v334
  %v500 = vunpack.c.l.b16 %v335
  %v501 = vunpack.c.h.b16 %v335
  %v502 = vunpack.c.l.b16 %v336
  %v503 = vunpack.c.h.b16 %v336
  %v504 = vunpack.c.l.b16 %v337
  %v505 = vunpack.c.h.b16 %v337
  %v506 = vunpack.c.l.b16 %v338
  %v507 = vunpack.c.h.b16 %v338
  %v508 = vunpack.c.l.b16 %v339
  %v509 = vunpack.c.h.b16 %v339
  %v510 = vunpack.c.l.b16 %v340
  %v511 = vunpack.c.h.b16 %v340
  %v512 = vunpack.c.l.b16 %v341
  %v513 = vunpack.c.h.b16 %v341
  %v514 = vunpack.c.l.b16 %v342
  %v515 = vunpack.c.h.b16 %v342
  %v516 = vunpack.c.l.b16 %v343
  %v517 = vunpack.c.h.b16 %v343
  %v518 = vunpack.c.l.b16 %v344
  %v519 = vunpack.c.h.b16 %v344
  %v520 = vunpack.c.l.b16 %v345
  %v521 = vunpack.c.h.b16 %v345
  %v522 = vunpack.c.l.b16 %v346
  %v523 = vunpack.c.h.b16 %v346
  %v524 = vunpack.c.l.b16 %v347
  %v525 = vunpack.c.h.b16 %v347
  %v526 = vunpack.c.l.b16 %v348
  %v527 = vunpack.c.h.b16 %v348
  %v528 = vunpack.c.l.b16 %v349
  %v529 = vunpack.c.h.b16 %v349
  %v530 = vunpack.c.l.b16 %v350
  %v531 = vunpack.c.h.b16 %v350
  %v532 = vunpack.c.l.b16 %v351
  %v533 = vunpack.c.h.b16 %v351
  %v534 = vunpack.c.l.b16 %v352
  %v535 = vunpack.c.h.b16 %v352
  %v536 = vunpack.c.l.b16 %v353
  %v537 = vunpack.c.h.b16 %v353
  %v538 = vunpack.c.l.b16 %v354
  %v539 = vunpack.c.h.b16 %v354
  %v540 = vunpack.c.l.b16 %v355
  %v541 = vunpack.c.h.b16 %v355
  %v542 = vunpack.c.l.b16 %v356
  %v543 = vunpack.c.h.b16 %v356
  %v544 = vunpack.c.l.b16 %v357
  %v545 = vunpack.c.h.b16 %v357
  %v546 = vunpack.c.l.b16 %v358
  %v547 = vunpack.c.h.b16 %v358
  %v548 = vunpack.c.l.b16 %v359
  %v549 = vunpack.c.h.b16 %v359
  %v550 = vunpack.c.l.b16 %v360
  %v551 = vunpack.c.h.b16 %v360
  %v552 = vunpack.c.l.b16 %v361
  %v553 = vunpack.c.h.b16 %v361
  %v554 = vunpack.c.l.b16 %v362
  %v555 = vunpack.c.h.b16 %v362
  %v556 = vunpack.c.l.b16 %v363
  %v557 = vunpack.c.h.b16 %v363
  %v558 = vunpack.c.l.b16 %v364
  %v559 = vunpack.c.h.b16 %v364
  %v560 = vunpack.c.l.b16 %v365
  %v561 = vunpack.c.h.b16 %v365
  %v562 = vunpack.c.l.b16 %v366
  %v563 = vunpack.c.h.b16 %v366
  %v564 = vunpack.c.l.b16 %v367
  %v565 = vunpack.c.h.b16 %v367
  %v566 = vpack.c.b16 %v440, %v438
  %v567 = vpack.c.b16 %v441, %v439
  %v568 = vpack.c.b16 %v444, %v442
  %v569 = vpack.c.b16 %v445, %v443
  %v570 = vpack.c.b16 %v448, %v446
  %v571 = vpack.c.b16 %v449, %v447
  %v572 = vpack.c.b16 %v452, %v450
  %v573 = vpack.c.b16 %v453, %v451
  %v574 = vpack.c.b16 %v456, %v454
  %v575 = vpack.c.b16 %v457, %v455
  %v576 = vpack.c.b16 %v460, %v458
  %v577 = vpack.c.b16 %v461, %v459
  %v578 = vpack.c.b16 %v464, %v462
  %v579 = vpack.c.b16 %v465, %v463
  %v580 = vpack.c.b16 %v468, %v466
  %v581 = vpack.c.b16 %v469, %v467
  %v582 = vpack.c.b16 %v472, %v470
  %v583 = vpack.c.b16 %v473, %v471
  %v584 = vpack.c.b16 %v476, %v474
  %v585 = vpack.c.b16 %v477, %v475
  %v586 = vpack.c.b16 %v480, %v478
  %v587 = vpack.c.b16 %v481, %v479
  %v588 = vpack.c.b16 %v484, %v482
  %v589 = vpack.c.b16 %v485, %v483
  %v590 = vpack.c.b16 %v488, %v486
  %v591 = vpack.c.b16 %v489, %v487
  %v592 = vpack.c.b16 %v492, %v490
  %v593 = vpack.c.b16 %v493, %v491
  %v594 = vpack.c.b16 %v496, %v494
  %v595 = vpack.c.b16 %v497, %v495
  %v596 = vpack.c.b16 %v500, %v498
  %v597 = vpack.c.b16 %v501, %v499
  %v598 = vpack.c.b16 %v504, %v502
  %v599 = vpack.c.b16 %v505, %v503
  %v600 = vpack.c.b16 %v508, %v506
  %v601 = vpack.c.b16 %v509, %v507
  %v602 = vpack.c.b16 %v512, %v510
  %v603 = vpack.c.b16 %v513, %v511
  %v604 = vpack.c.b16 %v516, %v514
  %v605 = vpack.c.b16 %v517, %v515
  %v606 = vpack.c.b16 %v520, %v518
  %v607 = vpack.c.b16 %v521, %v519
  %v608 = vpack.c.b16 %v524, %v522
  %v609 = vpack.c.b16 %v525, %v523
  %v610 = vpack.c.b16 %v528, %v526
  %v611 = vpack.c.b16 %v529, %v527
  %v612 = vpack.c.b16 %v532, %v530
  %v613 = vpack.c.b16 %v533, %v531
  %v614 = vpack.c.b16 %v536, %v534
  %v615 = vpack.c.b16 %v537, %v535
  %v616 = vpack.c.b16 %v540, %v538
  %v617 = vpack.c.b16 %v541, %v539
  %v618 = vpack.c.b16 %v544, %v542
  %v619 = vpack.c.b16 %v545, %v543
  %v620 = vpack.c.b16 %v548, %v546
  %v621 = vpack.c.b16 %v549, %v547
  %v622 = vpack.c.b16 %v552, %v550
  %v623 = vpack.c.b16 %v553, %v551
  %v624 = vpack.c.b16 %v556, %v554
  %v625 = vpack.c.b16 %v557, %v555
  %v626 = vpack.c.b16 %v560, %v558
  %v627 = vpack.c.b16 %v561, %v559
  %v628 = vpack.c.b16 %v564, %v562
  %v629 = vpack.c.b16 %v565, %v563
  %694 = vmatpush.bf16.msra.mxu0 %v580
  %695 = vmatpush.bf16.msra.mxu0 %v578
  %696 = vmatpush.bf16.msra.mxu0 %v576
  %697 = vmatpush.bf16.msra.mxu0 %v574
  %698 = vmatpush.bf16.msra.mxu0 %v572
  %699 = vmatpush.bf16.msra.mxu0 %v570
  %700 = vmatpush.bf16.msra.mxu0 %v568
  %701 = vmatpush.bf16.msra.mxu0 %v566
  %702 = vmatmul.bf16.gmra.mxu0 %v300
  %v703 = vpop.f32.mrf.mxu0
  %v704 = vadd.f32 %v370, %v703
  %v705 = vpop.f32.mrf.mxu0
  %v706 = vadd.f32 %v370, %v705
  %707 = vdwg.mxu0
  %708 = vmatpush.bf16.msra.mxu0 %v596
  %709 = vmatpush.bf16.msra.mxu0 %v594
  %710 = vmatpush.bf16.msra.mxu0 %v592
  %711 = vmatpush.bf16.msra.mxu0 %v590
  %712 = vmatpush.bf16.msra.mxu0 %v588
  %713 = vmatpush.bf16.msra.mxu0 %v586
  %714 = vmatpush.bf16.msra.mxu0 %v584
  %715 = vmatpush.bf16.msra.mxu0 %v582
  %716 = vmatmul.bf16.gmra.mxu0 %v301
  %v717 = vpop.f32.mrf.mxu0
  %v718 = vadd.f32 %v704, %v717
  %v719 = vpop.f32.mrf.mxu0
  %v720 = vadd.f32 %v706, %v719
  %721 = vdwg.mxu0
  %722 = vmatpush.bf16.msra.mxu0 %v612
  %723 = vmatpush.bf16.msra.mxu0 %v610
  %724 = vmatpush.bf16.msra.mxu0 %v608
  %725 = vmatpush.bf16.msra.mxu0 %v606
  %726 = vmatpush.bf16.msra.mxu0 %v604
  %727 = vmatpush.bf16.msra.mxu0 %v602
  %728 = vmatpush.bf16.msra.mxu0 %v600
  %729 = vmatpush.bf16.msra.mxu0 %v598
  %730 = vmatmul.bf16.gmra.mxu0 %v302
  %v731 = vpop.f32.mrf.mxu0
  %v732 = vadd.f32 %v718, %v731
  %v733 = vpop.f32.mrf.mxu0
  %v734 = vadd.f32 %v720, %v733
  %735 = vdwg.mxu0
  %736 = vmatpush.bf16.msra.mxu0 %v628
  %737 = vmatpush.bf16.msra.mxu0 %v626
  %738 = vmatpush.bf16.msra.mxu0 %v624
  %739 = vmatpush.bf16.msra.mxu0 %v622
  %740 = vmatpush.bf16.msra.mxu0 %v620
  %741 = vmatpush.bf16.msra.mxu0 %v618
  %742 = vmatpush.bf16.msra.mxu0 %v616
  %743 = vmatpush.bf16.msra.mxu0 %v614
  %744 = vmatmul.bf16.gmra.mxu0 %v303
  %v745 = vpop.f32.mrf.mxu0
  %v746 = vadd.f32 %v732, %v745
  %v747 = vpop.f32.mrf.mxu0
  %v748 = vadd.f32 %v734, %v747
  %749 = vdwg.mxu0
  %750 = vmatpush.bf16.msra.mxu0 %v581
  %751 = vmatpush.bf16.msra.mxu0 %v579
  %752 = vmatpush.bf16.msra.mxu0 %v577
  %753 = vmatpush.bf16.msra.mxu0 %v575
  %754 = vmatpush.bf16.msra.mxu0 %v573
  %755 = vmatpush.bf16.msra.mxu0 %v571
  %756 = vmatpush.bf16.msra.mxu0 %v569
  %757 = vmatpush.bf16.msra.mxu0 %v567
  %758 = vmatmul.bf16.gmra.mxu0 %v300
  %v759 = vpop.f32.mrf.mxu0
  %v760 = vadd.f32 %v371, %v759
  %v761 = vpop.f32.mrf.mxu0
  %v762 = vadd.f32 %v371, %v761
  %763 = vdwg.mxu0
  %764 = vmatpush.bf16.msra.mxu0 %v597
  %765 = vmatpush.bf16.msra.mxu0 %v595
  %766 = vmatpush.bf16.msra.mxu0 %v593
  %767 = vmatpush.bf16.msra.mxu0 %v591
  %768 = vmatpush.bf16.msra.mxu0 %v589
  %769 = vmatpush.bf16.msra.mxu0 %v587
  %770 = vmatpush.bf16.msra.mxu0 %v585
  %771 = vmatpush.bf16.msra.mxu0 %v583
  %772 = vmatmul.bf16.gmra.mxu0 %v301
  %v773 = vpop.f32.mrf.mxu0
  %v774 = vadd.f32 %v760, %v773
  %v775 = vpop.f32.mrf.mxu0
  %v776 = vadd.f32 %v762, %v775
  %777 = vdwg.mxu0
  %778 = vmatpush.bf16.msra.mxu0 %v613
  %779 = vmatpush.bf16.msra.mxu0 %v611
  %780 = vmatpush.bf16.msra.mxu0 %v609
  %781 = vmatpush.bf16.msra.mxu0 %v607
  %782 = vmatpush.bf16.msra.mxu0 %v605
  %783 = vmatpush.bf16.msra.mxu0 %v603
  %784 = vmatpush.bf16.msra.mxu0 %v601
  %785 = vmatpush.bf16.msra.mxu0 %v599
  %786 = vmatmul.bf16.gmra.mxu0 %v302
  %v787 = vpop.f32.mrf.mxu0
  %v788 = vadd.f32 %v774, %v787
  %v789 = vpop.f32.mrf.mxu0
  %v790 = vadd.f32 %v776, %v789
  %791 = vdwg.mxu0
  %792 = vmatpush.bf16.msra.mxu0 %v629
  %793 = vmatpush.bf16.msra.mxu0 %v627
  %794 = vmatpush.bf16.msra.mxu0 %v625
  %795 = vmatpush.bf16.msra.mxu0 %v623
  %796 = vmatpush.bf16.msra.mxu0 %v621
  %797 = vmatpush.bf16.msra.mxu0 %v619
  %798 = vmatpush.bf16.msra.mxu0 %v617
  %799 = vmatpush.bf16.msra.mxu0 %v615
  %800 = vmatmul.bf16.gmra.mxu0 %v303
  %v801 = vpop.f32.mrf.mxu0
  %v802 = vadd.f32 %v788, %v801
  %v803 = vpop.f32.mrf.mxu0
  %v804 = vadd.f32 %v790, %v803
  %805 = vdwg.mxu0
  %v806 = vmax.f32 %v746, 0.0
  %v807 = vmax.f32 %v802, 0.0
  %v808 = vmax.f32 %v748, 0.0
  %v809 = vmax.f32 %v804, 0.0
  %v810 = vpack.c.bf16 %v808, %v806
  %v811 = vpack.c.bf16 %v809, %v807
  %v812 = vld [vmem:[%s5] sm:$0xf]
  %v813 = vld [vmem:[%s5 + $0x4] sm:$0xf]
  %v814 = vld [vmem:[%s5 + $0x8] sm:$0xf]
  %v815 = vld [vmem:[%s5 + $0xc] sm:$0xf]
  %v816 = vld [vmem:[%s5 + $0x10] sm:$0xf]
  %v817 = vld [vmem:[%s5 + $0x14] sm:$0xf]
  %v818 = vld [vmem:[%s5 + $0x18] sm:$0xf]
  %v819 = vld [vmem:[%s5 + $0x1c] sm:$0xf]
  %v820 = vld [vmem:[%s5 + $0x20] sm:$0xf]
  %v821 = vld [vmem:[%s5 + $0x24] sm:$0xf]
  %v822 = vld [vmem:[%s5 + $0x28] sm:$0xf]
  %v823 = vld [vmem:[%s5 + $0x2c] sm:$0xf]
  %v824 = vld [vmem:[%s5 + $0x30] sm:$0xf]
  %v825 = vld [vmem:[%s5 + $0x34] sm:$0xf]
  %v826 = vld [vmem:[%s5 + $0x38] sm:$0xf]
  %v827 = vld [vmem:[%s5 + $0x3c] sm:$0xf]
  %v828 = vld [vmem:[%s5 + $0x40] sm:$0xf]
  %v829 = vld [vmem:[%s5 + $0x44] sm:$0xf]
  %v830 = vld [vmem:[%s5 + $0x48] sm:$0xf]
  %v831 = vld [vmem:[%s5 + $0x4c] sm:$0xf]
  %v832 = vld [vmem:[%s5 + $0x50] sm:$0xf]
  %v833 = vld [vmem:[%s5 + $0x54] sm:$0xf]
  %v834 = vld [vmem:[%s5 + $0x58] sm:$0xf]
  %v835 = vld [vmem:[%s5 + $0x5c] sm:$0xf]
  %v836 = vld [vmem:[%s5 + $0x60] sm:$0xf]
  %v837 = vld [vmem:[%s5 + $0x64] sm:$0xf]
  %v838 = vld [vmem:[%s5 + $0x68] sm:$0xf]
  %v839 = vld [vmem:[%s5 + $0x6c] sm:$0xf]
  %v840 = vld [vmem:[%s5 + $0x70] sm:$0xf]
  %v841 = vld [vmem:[%s5 + $0x74] sm:$0xf]
  %v842 = vld [vmem:[%s5 + $0x78] sm:$0xf]
  %v843 = vld [vmem:[%s5 + $0x7c] sm:$0xf]
  %v844 = vld [vmem:[%s6] sm:$0x1]
  %v846 = vperm.slane %v844, 0
  %v880 = vunpack.c.l.b16 %v812
  %v881 = vunpack.c.l.b16 %v813
  %v882 = vunpack.c.l.b16 %v814
  %v883 = vunpack.c.l.b16 %v815
  %v884 = vunpack.c.l.b16 %v816
  %v885 = vunpack.c.l.b16 %v817
  %v886 = vunpack.c.l.b16 %v818
  %v887 = vunpack.c.l.b16 %v819
  %v888 = vunpack.c.l.b16 %v820
  %v889 = vunpack.c.l.b16 %v821
  %v890 = vunpack.c.l.b16 %v822
  %v891 = vunpack.c.l.b16 %v823
  %v892 = vunpack.c.l.b16 %v824
  %v893 = vunpack.c.l.b16 %v825
  %v894 = vunpack.c.l.b16 %v826
  %v895 = vunpack.c.l.b16 %v827
  %v896 = vunpack.c.l.b16 %v828
  %v897 = vunpack.c.l.b16 %v829
  %v898 = vunpack.c.l.b16 %v830
  %v899 = vunpack.c.l.b16 %v831
  %v900 = vunpack.c.l.b16 %v832
  %v901 = vunpack.c.l.b16 %v833
  %v902 = vunpack.c.l.b16 %v834
  %v903 = vunpack.c.l.b16 %v835
  %v904 = vunpack.c.l.b16 %v836
  %v905 = vunpack.c.l.b16 %v837
  %v906 = vunpack.c.l.b16 %v838
  %v907 = vunpack.c.l.b16 %v839
  %v908 = vunpack.c.l.b16 %v840
  %v909 = vunpack.c.l.b16 %v841
  %v910 = vunpack.c.l.b16 %v842
  %v911 = vunpack.c.l.b16 %v843
  %v912 = vpack.c.b16 %v881, %v880
  %v913 = vpack.c.b16 %v883, %v882
  %v914 = vpack.c.b16 %v885, %v884
  %v915 = vpack.c.b16 %v887, %v886
  %v916 = vpack.c.b16 %v889, %v888
  %v917 = vpack.c.b16 %v891, %v890
  %v918 = vpack.c.b16 %v893, %v892
  %v919 = vpack.c.b16 %v895, %v894
  %v920 = vpack.c.b16 %v897, %v896
  %v921 = vpack.c.b16 %v899, %v898
  %v922 = vpack.c.b16 %v901, %v900
  %v923 = vpack.c.b16 %v903, %v902
  %v924 = vpack.c.b16 %v905, %v904
  %v925 = vpack.c.b16 %v907, %v906
  %v926 = vpack.c.b16 %v909, %v908
  %v927 = vpack.c.b16 %v911, %v910
  %944 = vmatpush.bf16.msra.mxu0 %v919
  %945 = vmatpush.bf16.msra.mxu0 %v918
  %946 = vmatpush.bf16.msra.mxu0 %v917
  %947 = vmatpush.bf16.msra.mxu0 %v916
  %948 = vmatpush.bf16.msra.mxu0 %v915
  %949 = vmatpush.bf16.msra.mxu0 %v914
  %950 = vmatpush.bf16.msra.mxu0 %v913
  %951 = vmatpush.bf16.msra.mxu0 %v912
  %952 = vmatmul.bf16.gmra.mxu0 %v810
  %v953 = vpop.f32.mrf.mxu0
  %v954 = vadd.f32 %v846, %v953
  %v955 = vpop.f32.mrf.mxu0
  %v956 = vadd.f32 %v846, %v955
  %957 = vdwg.mxu0
  %958 = vmatpush.bf16.msra.mxu0 %v927
  %959 = vmatpush.bf16.msra.mxu0 %v926
  %960 = vmatpush.bf16.msra.mxu0 %v925
  %961 = vmatpush.bf16.msra.mxu0 %v924
  %962 = vmatpush.bf16.msra.mxu0 %v923
  %963 = vmatpush.bf16.msra.mxu0 %v922
  %964 = vmatpush.bf16.msra.mxu0 %v921
  %965 = vmatpush.bf16.msra.mxu0 %v920
  %966 = vmatmul.bf16.gmra.mxu0 %v811
  %v967 = vpop.f32.mrf.mxu0
  %v968 = vadd.f32 %v954, %v967
  %v969 = vpop.f32.mrf.mxu0
  %v970 = vadd.f32 %v956, %v969
  %971 = vdwg.mxu0
  %972 = vst [vmem:[%s7] sm:$0xff] %v968
  %973 = vst [vmem:[%s7 + $0x8] sm:$0xff] %v970
  // Predicated region
  $region30: #{nonlinear_classifier.1} parent=0 // pred_check
    _
  $region31: #{nonlinear_classifier.1} parent=0 // pred_check_branch
    %975 = sbr.rel (0) target = $region33
  $region32: #{nonlinear_classifier.1} parent=0 // pred_region
    _
  $region33: #{nonlinear_classifier.1} parent=0 // pred_fallthru
    _
  // Predicated region
  $region34: #{nonlinear_classifier.1} parent=0 // pred_check
    _
  $region35: #{nonlinear_classifier.1} parent=0 // pred_check_branch
    %977 = sbr.rel (0) target = $region37
  $region36: #{nonlinear_classifier.1} parent=0 // pred_region
    _
  $region37: #{nonlinear_classifier.1} parent=0 // pred_fallthru
    _

</llo_original>
